<compile_context>
chip_gen: v6e
topology: v6e:2x2x1
jax: 0.10.0
libtpu: 0.0.40
codegen_flags: <defaults>
</compile_context>

<pallas_src>
from typing import NamedTuple

import jax
import jax.numpy as jnp
from jax.experimental import pallas as pl
from jax.experimental.pallas import tpu as pltpu

_NEG_BIG = -1e30   # finite softmax mask sentinel
_ONES_COL = 0      # column of padded z holding constant 1.0 (MXU row-sum trick)
_EL_COL = 1        # column holding a_l·z   (source attention term)
_ER_COL = 2        # column holding a_r·z   (destination attention term)
_Z_OFF = 3         # z itself lives in columns [_Z_OFF, _Z_OFF + out_dim)


def _round_up(x, m):
    return (x + m - 1) // m * m


def _pick_tile(n_pad, want):
    """Largest multiple of 128 that divides n_pad and is <= want (>= 128)."""
    q = n_pad // 128
    best = 1
    for d in range(1, q + 1):
        if q % d == 0 and d * 128 <= want:
            best = d
    return best * 128


class SGATPrepared(NamedTuple):
    w_aug: jax.Array    # (din, dout_pad) bf16: [0, a_l-fold, a_r-fold, W.T, 0...]
    adj_i8: jax.Array   # (n_pad, n_pad) int8, adj[i, j] != 0 iff edge j -> i
    n: int
    din: int
    dout: int
    n_pad: int
    dout_pad: int


def sgat_preprocess(fc_w, attn_w, adj):
    """Hoisted per-graph / per-weight preprocessing — do ONCE and reuse across
    forward calls (the f32->int8 adjacency conversion is a full O(N^2) pass)."""
    dout, din = fc_w.shape
    assert attn_w.shape == (1, 2 * dout)
    n = adj.shape[0]
    assert adj.shape == (n, n)

    n_pad = _round_up(n, 128)
    dout_pad = _round_up(dout + _Z_OFF, 128)   # >= 3 spare cols: ones, el, er

    # Fold fc and attn_fc into one matmul: h @ w_aug gives
    #   col _EL_COL = z·a_l, col _ER_COL = z·a_r, cols [_Z_OFF:) = z.
    wt = fc_w.T.astype(jnp.float32)                                 # (din, dout)
    w_aug = jnp.zeros((din, dout_pad), jnp.float32)
    w_aug = w_aug.at[:, _EL_COL].set(wt @ attn_w[0, :dout])
    w_aug = w_aug.at[:, _ER_COL].set(wt @ attn_w[0, dout:])
    w_aug = w_aug.at[:, _Z_OFF:_Z_OFF + dout].set(wt)
    w_aug = w_aug.astype(jnp.bfloat16)

    adj_i8 = jnp.zeros((n_pad, n_pad), jnp.int8).at[:n, :n].set(
        (adj > 0).astype(jnp.int8))
    return SGATPrepared(w_aug, adj_i8, n, din, dout, n_pad, dout_pad)


# ---------------------------------------------------------------------------
# Kernel 1: projection prologue — single matmul gives z, el and er
# ---------------------------------------------------------------------------
def sgat_proj_kernel(h_ref, w_ref, z_ref, er_ref, elt_ref):
    # zfull columns: [unused, el, er, z_0 .. z_{D-1}, 0 ...]  (f32 MXU accumulation)
    zfull = jnp.dot(h_ref[...], w_ref[...], preferred_element_type=jnp.float32)
    er_ref[...] = zfull[:, _ER_COL:_ER_COL + 1]          # (T, 1) destination term
    elt_ref[...] = zfull[:, _EL_COL:_EL_COL + 1].T       # (1, T) source term
    # Constant 1.0 in column _ONES_COL: the aggregation matmul p @ z then also
    # produces sum_j p_ij (softmax denominator) in that column of acc for free.
    col = jax.lax.broadcasted_iota(jnp.int32, zfull.shape, 1)
    z_ref[...] = jnp.where(col == _ONES_COL, 1.0, zfull).astype(z_ref.dtype)


# ---------------------------------------------------------------------------
# Kernel 2: flash-style masked attention + aggregation (online softmax)
# ---------------------------------------------------------------------------
def sgat_attn_kernel(er_ref, elt_ref, z_ref, adj_ref, out_ref, m_ref, acc_ref):
    j = pl.program_id(1)

    @pl.when(j == 0)
    def _():
        # m starts at 0 (finite, >= any masked score): masked entries at -1e30
        # underflow exp() to exactly 0, so no p-side select is needed and
        # fully-masked (isolated) rows end up with denominator 0 (guarded below).
        m_ref[...] = jnp.zeros_like(m_ref)
        acc_ref[...] = jnp.zeros_like(acc_ref)

    scores = er_ref[...] + elt_ref[...]                   # (TD,1)+(1,TS) -> (TD,TS)
    e = jnp.maximum(scores, 0.01 * scores)                # leaky_relu, 2 VPU ops
    e = jnp.where(adj_ref[...] > 0, e, _NEG_BIG)          # adjacency mask

    m_prev = m_ref[...]
    m_new = jnp.maximum(m_prev, jnp.max(e, axis=-1, keepdims=True))
    scale = jnp.exp(m_prev - m_new)
    p = jnp.exp(e - m_new)                                # masked -> exactly 0
    acc_ref[...] = scale * acc_ref[...] + jnp.dot(
        p.astype(z_ref.dtype), z_ref[...], preferred_element_type=jnp.float32)
    m_ref[...] = m_new

    @pl.when(j == pl.num_programs(1) - 1)
    def _():
        acc = acc_ref[...]
        l = acc[:, _ONES_COL:_ONES_COL + 1]               # row-sum from MXU ones column
        denom = jnp.where(l > 0.0, l, 1.0)                # isolated dst rows -> 0 output
        out_ref[...] = (acc * pl.reciprocal(denom, approx=True)).astype(out_ref.dtype)


# ---------------------------------------------------------------------------
# Wrappers
# ---------------------------------------------------------------------------
def sgat_apply(h, prep, *, tile_dst=1024, tile_src=512, tile_proj=256):
    """h: (N, in_dim) f32; prep: SGATPrepared. Returns (N, out_dim) f32."""
    w_aug, adj_i8, n, din, dout, n_pad, dout_pad = prep
    assert h.shape == (n, din)

    # Tile selection: multiples of 128 dividing n_pad.  tile_dst is the big lever
    # (z is re-read from HBM once per dst tile) but is capped at n_pad/2 so the
    # "parallel" dst axis keeps >= 2 tiles (both v7x TensorCores stay busy).
    if n_pad > 256:
        tile_dst = min(tile_dst, n_pad // 2)
    td = _pick_tile(n_pad, tile_dst)
    ts = _pick_tile(n_pad, tile_src)
    tp = _pick_tile(n_pad, tile_proj)

    h_p = jnp.zeros((n_pad, din), jnp.bfloat16).at[:n].set(h.astype(jnp.bfloat16))

    # ---- 1) projection prologue --------------------------------------------
    z_bf, er, el_t = pl.pallas_call(
        sgat_proj_kernel,
        out_shape=(jax.ShapeDtypeStruct((n_pad, dout_pad), jnp.bfloat16),
                   jax.ShapeDtypeStruct((n_pad, 1), jnp.float32),
                   jax.ShapeDtypeStruct((1, n_pad), jnp.float32)),
        grid_spec=pltpu.PrefetchScalarGridSpec(
            num_scalar_prefetch=0,
            grid=(n_pad // tp,),
            in_specs=[pl.BlockSpec((tp, din), lambda i: (i, 0)),
                      pl.BlockSpec((din, dout_pad), lambda i: (0, 0))],
            out_specs=[pl.BlockSpec((tp, dout_pad), lambda i: (i, 0)),
                       pl.BlockSpec((tp, 1), lambda i: (i, 0)),
                       pl.BlockSpec((1, tp), lambda i: (0, i))]),
        compiler_params=pltpu.CompilerParams(
            dimension_semantics=("parallel",)),
    )(h_p, w_aug)

    # ---- 2) tiled masked attention + aggregation ----------------------------
    out_pad = pl.pallas_call(
        sgat_attn_kernel,
        out_shape=jax.ShapeDtypeStruct((n_pad, dout_pad), jnp.bfloat16),
        grid_spec=pltpu.PrefetchScalarGridSpec(
            num_scalar_prefetch=0,
            grid=(n_pad // td, n_pad // ts),
            in_specs=[pl.BlockSpec((td, 1), lambda i, j: (i, 0)),
                      pl.BlockSpec((1, ts), lambda i, j: (0, j)),
                      pl.BlockSpec((ts, dout_pad), lambda i, j: (j, 0)),
                      pl.BlockSpec((td, ts), lambda i, j: (i, j))],
            out_specs=pl.BlockSpec((td, dout_pad), lambda i, j: (i, 0)),
            scratch_shapes=[pltpu.VMEM((td, 1), jnp.float32),
                            pltpu.VMEM((td, dout_pad), jnp.float32)]),
        compiler_params=pltpu.CompilerParams(
            dimension_semantics=("parallel", "arbitrary"),
            vmem_limit_bytes=32 * 1024 * 1024),
    )(er, el_t, z_bf, adj_i8)

    return out_pad[:n, _Z_OFF:_Z_OFF + dout].astype(jnp.float32)


def sgat_layer(h, fc_w, attn_w, adj, *, tile_dst=1024, tile_src=512, tile_proj=256):
    """One-shot convenience wrapper. For repeated forward passes on the same
    graph, call sgat_preprocess once and reuse the result with sgat_apply."""
    prep = sgat_preprocess(fc_w, attn_w, adj)
    return sgat_apply(h, prep, tile_dst=tile_dst, tile_src=tile_src,
                      tile_proj=tile_proj)


# ---------------------------------------------------------------------------
# Pure-JAX f32 reference
# ---------------------------------------------------------------------------
def _reference(h, fc_w, attn_w, adj):
    z = h @ fc_w.T
    d = z.shape[1]
    el = z @ attn_w[0, :d]                      # source term
    er = z @ attn_w[0, d:]                      # destination term
    scores = er[:, None] + el[None, :]
    e = jnp.where(scores > 0, scores, 0.01 * scores)
    e = jnp.where(adj > 0, e, -1e30)
    alpha = jax.nn.softmax(e, axis=-1)
    alpha = jnp.where(adj > 0, alpha, 0.0)
    alpha = alpha / jnp.sum(alpha, axis=-1, keepdims=True)
    return alpha @ z


if __name__ == "__main__":
    N, IN_DIM, OUT_DIM = 300, 32, 32

    key = jax.random.PRNGKey(0)
    k_h, k_w, k_a, k_adj = jax.random.split(key, 4)

    h = jax.random.normal(k_h, (N, IN_DIM), dtype=jnp.float32)

    # Deterministic "Kaiming-uniform-like" init (shapes match nn.Linear).
    bound_w = 1.0 / (IN_DIM ** 0.5)
    fc_w = jax.random.uniform(k_w, (OUT_DIM, IN_DIM), jnp.float32,
                              minval=-bound_w, maxval=bound_w)
    bound_a = 1.0 / ((2 * OUT_DIM) ** 0.5)
    attn_w = jax.random.uniform(k_a, (1, 2 * OUT_DIM), jnp.float32,
                                minval=-bound_a, maxval=bound_a)

    # Random sparse-ish adjacency + self loops so every node has an incoming edge.
    adj = (jax.random.uniform(k_adj, (N, N)) < 0.15).astype(jnp.float32)
    adj = jnp.maximum(adj, jnp.eye(N, dtype=jnp.float32))

    # Preprocess once per graph (hoisted), then apply.  Small tiles so the demo
    # exercises a real multi-tile grid (3 dst x 3 src).
    prep = sgat_preprocess(fc_w, attn_w, adj)
    out = sgat_apply(h, prep, tile_dst=128, tile_src=128, tile_proj=128)
    jax.block_until_ready(out)

    ref = _reference(h, fc_w, attn_w, adj)
    assert out.shape == (N, OUT_DIM)
    assert jnp.allclose(out, ref, atol=5e-2, rtol=5e-2), \
        float(jnp.max(jnp.abs(out - ref)))

    print("KERNEL_OK")
</pallas_src>

<mosaic_0001>
module attributes {stable_mosaic.version = 11 : i64} {
  func.func @sgat_proj_kernel(%arg0: i32, %arg1: memref<128x32xbf16, #tpu.memory_space<vmem>>, %arg2: memref<32x128xbf16, #tpu.memory_space<vmem>>, %arg3: memref<128x128xbf16, #tpu.memory_space<vmem>>, %arg4: memref<128x1xf32, #tpu.memory_space<vmem>>, %arg5: memref<1x128xf32, #tpu.memory_space<vmem>>) attributes {dimension_semantics = [#tpu.dimension_semantics<parallel>], iteration_bounds = array<i64: 3>, scalar_prefetch = 0 : i64, scratch_operands = 0 : i64, tpu.core_type = #tpu.core_type<tc>, window_params = [{transform_indices = @transform_0, window_bounds = array<i64: 128, 32>}, {pipeline_mode = #tpu.pipeline_mode<synchronous>, transform_indices = @transform_1, window_bounds = array<i64: 32, 128>}, {transform_indices = @transform_2, window_bounds = array<i64: 128, 128>}, {transform_indices = @transform_3, window_bounds = array<i64: 128, 1>}, {transform_indices = @transform_4, window_bounds = array<i64: 1, 128>}]} {
    %c0 = arith.constant 0 : index
    %c0_0 = arith.constant 0 : index
    %0 = vector.load %arg1[%c0, %c0_0] : memref<128x32xbf16, #tpu.memory_space<vmem>>, vector<128x32xbf16>
    %c0_1 = arith.constant 0 : index
    %c0_2 = arith.constant 0 : index
    %1 = vector.load %arg2[%c0_1, %c0_2] : memref<32x128xbf16, #tpu.memory_space<vmem>>, vector<32x128xbf16>
    %cst = arith.constant dense<0.000000e+00> : vector<128x128xf32>
    %2 = tpu.matmul %0, %1, %cst {dimension_numbers = #tpu.dot_dimension_numbers<[1], [0], [0], [1], [0, 0, 1, 1], [], []>} : vector<128x32xbf16>, vector<32x128xbf16>, vector<128x128xf32> -> vector<128x128xf32>
    %3 = vector.extract_strided_slice %2 {offsets = [0, 2], sizes = [128, 1], strides = [1, 1]} : vector<128x128xf32> to vector<128x1xf32>
    %c0_3 = arith.constant 0 : index
    %c0_4 = arith.constant 0 : index
    %4 = vector.load %arg4[%c0_3, %c0_4] : memref<128x1xf32, #tpu.memory_space<vmem>>, vector<128x1xf32>
    tpu.vector_store %arg4[%c0_3, %c0_4], %3 {strides = array<i32>} : memref<128x1xf32, #tpu.memory_space<vmem>>, vector<128x1xf32>,
    %5 = vector.extract_strided_slice %2 {offsets = [0, 1], sizes = [128, 1], strides = [1, 1]} : vector<128x128xf32> to vector<128x1xf32>
    %6 = tpu.transpose %5, [1, 0] : vector<128x1xf32> -> vector<1x128xf32>
    %c0_5 = arith.constant 0 : index
    %c0_6 = arith.constant 0 : index
    %7 = vector.load %arg5[%c0_5, %c0_6] : memref<1x128xf32, #tpu.memory_space<vmem>>, vector<1x128xf32>
    tpu.vector_store %arg5[%c0_5, %c0_6], %6 {strides = array<i32>} : memref<1x128xf32, #tpu.memory_space<vmem>>, vector<1x128xf32>,
    %8 = tpu.iota {dimensions = array<i32: 1>} : vector<128x128xi32>
    %c0_i32 = arith.constant 0 : i32
    %9 = vector.broadcast %c0_i32 : i32 to vector<128x128xi32>
    %10 = arith.cmpi eq, %8, %9 : vector<128x128xi32>
    %cst_7 = arith.constant 1.000000e+00 : f32
    %11 = vector.broadcast %cst_7 : f32 to vector<128x128xf32>
    %12 = arith.select %10, %11, %2 : vector<128x128xi1>, vector<128x128xf32>
    %13 = arith.truncf %12 : vector<128x128xf32> to vector<128x128xbf16>
    %c0_8 = arith.constant 0 : index
    %c0_9 = arith.constant 0 : index
    %14 = vector.load %arg3[%c0_8, %c0_9] : memref<128x128xbf16, #tpu.memory_space<vmem>>, vector<128x128xbf16>
    tpu.vector_store %arg3[%c0_8, %c0_9], %13 {strides = array<i32>} : memref<128x128xbf16, #tpu.memory_space<vmem>>, vector<128x128xbf16>,
    return
  }
  func.func @transform_0(%arg0: i32) -> (i32, i32) {
    %c0_i32 = arith.constant 0 : i32
    %c0_i32_0 = arith.constant 0 : i32
    return %arg0, %c0_i32 : i32, i32
  }
  func.func @transform_1(%arg0: i32) -> (i32, i32) {
    %c0_i32 = arith.constant 0 : i32
    %c0_i32_0 = arith.constant 0 : i32
    %c0_i32_1 = arith.constant 0 : i32
    return %c0_i32, %c0_i32_0 : i32, i32
  }
  func.func @transform_2(%arg0: i32) -> (i32, i32) {
    %c0_i32 = arith.constant 0 : i32
    %c0_i32_0 = arith.constant 0 : i32
    return %arg0, %c0_i32 : i32, i32
  }
  func.func @transform_3(%arg0: i32) -> (i32, i32) {
    %c0_i32 = arith.constant 0 : i32
    %c0_i32_0 = arith.constant 0 : i32
    return %arg0, %c0_i32 : i32, i32
  }
  func.func @transform_4(%arg0: i32) -> (i32, i32) {
    %c0_i32 = arith.constant 0 : i32
    %c0_i32_0 = arith.constant 0 : i32
    return %c0_i32, %arg0 : i32, i32
  }
}

</mosaic_0001>

<llo_original>
// kernel: tpu_custom_call.1
$region0: #{tpu_custom_call.1}
  #allocation0 [shape = 'u32[]', space=smem, size = 0x4, offset = 0x4, fixed_abs, tag = 'smem constant byte address 0x4 - core index']
  #allocation1 [shape = 'u32[144,128]{1,0:T(1,128)}', space=vmem, size = 0x12000, scoped, tag = 'internal scratch']
  %s0 = inlined_call_operand.vmem [shape: bf16[384,32], index: 0, kind: input, shape index: {}]
  %s1 = inlined_call_operand.vmem [shape: bf16[32,128], index: 1, kind: input, shape index: {}]
  %s2 = inlined_call_operand.hbm [shape: bf16[384,128], index: 2, kind: output, shape index: {0}]
  %s3 = inlined_call_operand.vmem [shape: f32[384,1], index: 3, kind: output, shape index: {1}]
  %s4 = inlined_call_operand.hbm [shape: f32[1,384], index: 4, kind: output, shape index: {2}]
  %5 = xla_tuple %s2, %s3, %s4
  %s6 = sld [smem:[#allocation0]]
  $region57: #{tpu_custom_call.1} parent=0
    _
  %s8 = ssub.s32 1, %s6
  %s9 = scalar_select 0, %s8, %s6
  $region1: #{tpu_custom_call.1} parent=0
    #allocation2 [shape = 'u8[65536]{0}', space=vmem, size = 0x10000, scoped, tag = 'output window, operand 0']
    #allocation3 [shape = 's32[2]{0}', space=sflag, size = 0x8, scoped, tag = 'scoped memory for tpu_custom_call.1']
    #allocation4 [shape = 'u8[1024]{0}', space=vmem, size = 0x400, scoped, tag = 'output window, operand 2']
    #allocation5 [shape = 's32[2]{0}', space=sflag, size = 0x8, scoped, tag = 'scoped memory for tpu_custom_call.1']
    %10 = vsyncpa [#allocation3], 0
    %s11 = scalar_lea.sflag [#allocation3], 1
    %12 = vsyncpa %s11, 0
    %13 = vsyncpa [#allocation5], 0
    %s14 = scalar_lea.sflag [#allocation5], 1
    %15 = vsyncpa %s14, 0
    loop: start=0, step=1, limit=5
    $region2: #{tpu_custom_call.1} parent=1 // loop_pre_header
      _
    $region3: #{tpu_custom_call.1} parent=1 // loop_header
      %s17 = sphi 0, %s21
      %p18 = scmp.ge.s32.totalorder %s17, 5
      %s27 = sphi 0, %s29
      %s30 = sphi 0, %s27
      %s31 = sphi 0, %s30
      %s47 = sphi 0, %s31
      %s51 = sphi 0, %s51
      %s53 = sphi 0, %s51
      %s54 = sphi 0, %s53
      %s68 = sphi 0, %s54
      %s74 = sphi 0, %s76
      %s77 = sphi 0, %s74
      %s78 = sphi 0, %s77
      %s94 = sphi 0, %s78
      %s100 = sphi 0, %s102
      %s103 = sphi 0, %s100
      %s104 = sphi 0, %s103
      %s120 = sphi 0, %s104
      %s126 = sphi 0, %s128
      %s129 = sphi 0, %s126
      %s130 = sphi 0, %s129
      %s146 = sphi 0, %s130
    $region4: #{tpu_custom_call.1} parent=1 // loop_header_branch
      %20 = sbr.rel (%p18) target = $region8
    $region5: #{tpu_custom_call.1} parent=1 // loop_body
      %s22 = ssub.s32 %s17, 1
      %s23 = ssub.s32 %s17, 2
      %s24 = sadd.s32 %s17, 1
      %s25 = ssub.s32 %s17, %s24
      %p26 = scmp.eq.s32.totalorder %s25, 0
      %s28 = sadd.s32 %s27, 1
      %s29 = scalar_select %p26, %s27, %s28
      %p32 = pneg %p26
      %p33 = scmp.eq.s32.totalorder %s17, 2
      %p34 = por %p32, %p33
      %p35 = scmp.ne.s32.totalorder %s27, %s30
      %p36 = scmp.eq.s32.totalorder %s17, 0
      %p37 = por %p35, %p36
      %p38 = scmp.ne.s32.totalorder %s27, %s30
      %p39 = scmp.eq.s32.totalorder %s22, 2
      %p40 = por %p38, %p39
      %p41 = scmp.ne.s32.totalorder %s30, %s31
      %p42 = scmp.eq.s32.totalorder %s22, 0
      %p43 = por %p41, %p42
      %p44 = scmp.ne.s32.totalorder %s30, %s31
      %p45 = scmp.eq.s32.totalorder %s23, 2
      %p46 = por %p44, %p45
      %p48 = scmp.ne.s32.totalorder %s31, %s47
      %p49 = scmp.eq.s32.totalorder %s23, 0
      %p50 = por %p48, %p49
      %s52 = sadd.s32 %s51, 1
      %p55 = scmp.eq.s32.totalorder %s17, 2
      %p56 = scmp.ne.s32.totalorder %s51, %s53
      %p57 = scmp.eq.s32.totalorder %s17, 0
      %p58 = por %p56, %p57
      %p59 = scmp.ne.s32.totalorder %s51, %s53
      %p60 = scmp.eq.s32.totalorder %s22, 2
      %p61 = por %p59, %p60
      %p62 = scmp.ne.s32.totalorder %s53, %s54
      %p63 = scmp.eq.s32.totalorder %s22, 0
      %p64 = por %p62, %p63
      %p65 = scmp.ne.s32.totalorder %s53, %s54
      %p66 = scmp.eq.s32.totalorder %s23, 2
      %p67 = por %p65, %p66
      %p69 = scmp.ne.s32.totalorder %s54, %s68
      %p70 = scmp.eq.s32.totalorder %s23, 0
      %p71 = por %p69, %p70
      %s72 = ssub.s32 %s17, %s24
      %p73 = scmp.eq.s32.totalorder %s72, 0
      %s75 = sadd.s32 %s74, 1
      %s76 = scalar_select %p73, %s74, %s75
      %p79 = pneg %p73
      %p80 = scmp.eq.s32.totalorder %s17, 2
      %p81 = por %p79, %p80
      %p82 = scmp.ne.s32.totalorder %s74, %s77
      %p83 = scmp.eq.s32.totalorder %s17, 0
      %p84 = por %p82, %p83
      %p85 = scmp.ne.s32.totalorder %s74, %s77
      %p86 = scmp.eq.s32.totalorder %s22, 2
      %p87 = por %p85, %p86
      %p88 = scmp.ne.s32.totalorder %s77, %s78
      %p89 = scmp.eq.s32.totalorder %s22, 0
      %p90 = por %p88, %p89
      %p91 = scmp.ne.s32.totalorder %s77, %s78
      %p92 = scmp.eq.s32.totalorder %s23, 2
      %p93 = por %p91, %p92
      %p95 = scmp.ne.s32.totalorder %s78, %s94
      %p96 = scmp.eq.s32.totalorder %s23, 0
      %p97 = por %p95, %p96
      %s98 = ssub.s32 %s17, %s24
      %p99 = scmp.eq.s32.totalorder %s98, 0
      %s101 = sadd.s32 %s100, 1
      %s102 = scalar_select %p99, %s100, %s101
      %p105 = pneg %p99
      %p106 = scmp.eq.s32.totalorder %s17, 2
      %p107 = por %p105, %p106
      %p108 = scmp.ne.s32.totalorder %s100, %s103
      %p109 = scmp.eq.s32.totalorder %s17, 0
      %p110 = por %p108, %p109
      %p111 = scmp.ne.s32.totalorder %s100, %s103
      %p112 = scmp.eq.s32.totalorder %s22, 2
      %p113 = por %p111, %p112
      %p114 = scmp.ne.s32.totalorder %s103, %s104
      %p115 = scmp.eq.s32.totalorder %s22, 0
      %p116 = por %p114, %p115
      %p117 = scmp.ne.s32.totalorder %s103, %s104
      %p118 = scmp.eq.s32.totalorder %s23, 2
      %p119 = por %p117, %p118
      %p121 = scmp.ne.s32.totalorder %s104, %s120
      %p122 = scmp.eq.s32.totalorder %s23, 0
      %p123 = por %p121, %p122
      %s124 = ssub.s32 %s17, %s24
      %p125 = scmp.eq.s32.totalorder %s124, 0
      %s127 = sadd.s32 %s126, 1
      %s128 = scalar_select %p125, %s126, %s127
      %p131 = pneg %p125
      %p132 = scmp.eq.s32.totalorder %s17, 2
      %p133 = por %p131, %p132
      %p134 = scmp.ne.s32.totalorder %s126, %s129
      %p135 = scmp.eq.s32.totalorder %s17, 0
      %p136 = por %p134, %p135
      %p137 = scmp.ne.s32.totalorder %s126, %s129
      %p138 = scmp.eq.s32.totalorder %s22, 2
      %p139 = por %p137, %p138
      %p140 = scmp.ne.s32.totalorder %s129, %s130
      %p141 = scmp.eq.s32.totalorder %s22, 0
      %p142 = por %p140, %p141
      %p143 = scmp.ne.s32.totalorder %s129, %s130
      %p144 = scmp.eq.s32.totalorder %s23, 2
      %p145 = por %p143, %p144
      %p147 = scmp.ne.s32.totalorder %s130, %s146
      %p148 = scmp.eq.s32.totalorder %s23, 0
      %p149 = por %p147, %p148
      %p150 = scmp.le.s32.totalorder 1, %s17
      %p151 = scmp.lt.s32.totalorder %s17, 4
      %p152 = pnand %p150, %p151
      %p153 = pneg %p152
      // Predicated region
      $region9: #{tpu_custom_call.1} parent=5 // pred_check
        _
      $region10: #{tpu_custom_call.1} parent=5 // pred_check_branch
        %155 = sbr.rel (%p152) target = $region12
      $region11: #{tpu_custom_call.1} parent=5 // pred_region
        %s156 = ssub.s32 %s17, 1
        // Predicated region
        $region13: #{tpu_custom_call.1} parent=11 // pred_check
          %p157 = pneg %p64
        $region14: #{tpu_custom_call.1} parent=11 // pred_check_branch
          %159 = sbr.rel (%p157) target = $region16
        $region15: #{tpu_custom_call.1} parent=11 // pred_region
          _
        $region16: #{tpu_custom_call.1} parent=11 // pred_fallthru
          _
      $region12: #{tpu_custom_call.1} parent=5 // pred_fallthru
        _
      %p160 = scmp.lt.s32.totalorder %s17, 3
      // Predicated region
      $region17: #{tpu_custom_call.1} parent=5 // pred_check
        %p161 = pneg %p160
      $region18: #{tpu_custom_call.1} parent=5 // pred_check_branch
        %163 = sbr.rel (%p161) target = $region20
      $region19: #{tpu_custom_call.1} parent=5 // pred_region
        // Predicated region
        $region21: #{tpu_custom_call.1} parent=19 // pred_check
          %p164 = pneg %p37
        $region22: #{tpu_custom_call.1} parent=19 // pred_check_branch
          %166 = sbr.rel (%p164) target = $region24
        $region23: #{tpu_custom_call.1} parent=19 // pred_region
          %s167 = smul.u32 16, %s17
          %p168 = scmp.lt.s32.totalorder %s167, 47
          %s169 = scalar_select %p168, %s167, 47
          %s170 = smul.addr %s169, 4
          %s171 = scalar_lea.vmem %s0, %s170
          %s172 = smul.u32 16, %s17
        $region24: #{tpu_custom_call.1} parent=19 // pred_fallthru
          _
      $region20: #{tpu_custom_call.1} parent=5 // pred_fallthru
        _
      %p173 = scmp.le.s32.totalorder 1, %s17
      %p174 = scmp.lt.s32.totalorder %s17, 4
      %p175 = pnand %p173, %p174
      %p176 = pneg %p175
      // Predicated region
      $region25: #{tpu_custom_call.1} parent=5 // pred_check
        _
      $region26: #{tpu_custom_call.1} parent=5 // pred_check_branch
        %178 = sbr.rel (%p175) target = $region28
      $region27: #{tpu_custom_call.1} parent=5 // pred_region
        %s179 = ssub.s32 %s17, 1
        %s180 = smul.u32 16, %s22
        %p181 = scmp.lt.s32.totalorder %s180, 47
        %s182 = scalar_select %p181, %s180, 47
        %s183 = smul.addr %s182, 4
        %s184 = scalar_lea.vmem %s0, %s183
        %p185 = pneg %p43
        %p186 = pneg %p40
        %p187 = pneg %p64
        %p188 = pneg %p61
        %p189 = pneg %p90
        %p190 = pneg %p87
        %s191 = sand.u32 %s77, 1
        %s192 = scalar_lea.sflag [#allocation3], %s191
        %s193 = sand.u32 %s77, 1
        %s194 = smul.addr %s193, 64
        %s195 = scalar_lea.vmem [#allocation2], %s194
        %p196 = pneg %p116
        %p197 = pneg %p113
        %s198 = smul.u32 16, %s22
        %p199 = scmp.lt.s32.totalorder %s198, 47
        %s200 = scalar_select %p199, %s198, 47
        %s201 = smul.addr %s200, 8
        %s202 = scalar_lea.vmem %s3, %s201
        %p203 = pneg %p142
        %p204 = pneg %p139
        %s205 = sand.u32 %s129, 1
        %s206 = scalar_lea.sflag [#allocation5], %s205
        %s207 = sand.u32 %s129, 1
        %s208 = scalar_lea.vmem [#allocation4], %s207
        %s209 = smul.u32 16, %s22
        %p210 = scmp.lt.s32.totalorder %s209, 47
        %s211 = scalar_select %p210, %s209, 47
        %s212 = smul.addr %s211, 4
        %s213 = scalar_lea.vmem %s0, %s212
        %s214 = smul.u32 16, %s22
        %s215 = smul.u32 16, %s22
        %s216 = smul.u32 16, %s22
        %p217 = scmp.lt.s32.totalorder %s216, 47
        %s218 = scalar_select %p217, %s216, 47
        %s219 = smul.addr %s218, 8
        %s220 = scalar_lea.vmem %s3, %s219
        %s221 = smul.u32 16, %s22
        %v223 = vld [vmem:[%s213] sm:$0xf]
        %v224 = vld [vmem:[%s213 + $0x4] sm:$0xf]
        %v225 = vld [vmem:[%s213 + $0x8] sm:$0xf]
        %v226 = vld [vmem:[%s213 + $0xc] sm:$0xf]
        %v227 = vld [vmem:[%s213 + $0x10] sm:$0xf]
        %v228 = vld [vmem:[%s213 + $0x14] sm:$0xf]
        %v229 = vld [vmem:[%s213 + $0x18] sm:$0xf]
        %v230 = vld [vmem:[%s213 + $0x1c] sm:$0xf]
        %v231 = vld [vmem:[%s213 + $0x20] sm:$0xf]
        %v232 = vld [vmem:[%s213 + $0x24] sm:$0xf]
        %v233 = vld [vmem:[%s213 + $0x28] sm:$0xf]
        %v234 = vld [vmem:[%s213 + $0x2c] sm:$0xf]
        %v235 = vld [vmem:[%s213 + $0x30] sm:$0xf]
        %v236 = vld [vmem:[%s213 + $0x34] sm:$0xf]
        %v237 = vld [vmem:[%s213 + $0x38] sm:$0xf]
        %v238 = vld [vmem:[%s213 + $0x3c] sm:$0xf]
        %v239 = vld [vmem:[%s1] sm:$0xf]
        %v240 = vld [vmem:[%s1 + $0x4] sm:$0xf]
        %v241 = vld [vmem:[%s1 + $0x8] sm:$0xf]
        %v242 = vld [vmem:[%s1 + $0xc] sm:$0xf]
        %v259 = vunpack.c.l.b16 %v223
        %v260 = vunpack.c.l.b16 %v224
        %v261 = vunpack.c.l.b16 %v225
        %v262 = vunpack.c.l.b16 %v226
        %v263 = vunpack.c.l.b16 %v227
        %v264 = vunpack.c.l.b16 %v228
        %v265 = vunpack.c.l.b16 %v229
        %v266 = vunpack.c.l.b16 %v230
        %v267 = vunpack.c.l.b16 %v231
        %v268 = vunpack.c.l.b16 %v232
        %v269 = vunpack.c.l.b16 %v233
        %v270 = vunpack.c.l.b16 %v234
        %v271 = vunpack.c.l.b16 %v235
        %v272 = vunpack.c.l.b16 %v236
        %v273 = vunpack.c.l.b16 %v237
        %v274 = vunpack.c.l.b16 %v238
        %v275 = vpack.c.b16 %v260, %v259
        %v276 = vpack.c.b16 %v262, %v261
        %v277 = vpack.c.b16 %v264, %v263
        %v278 = vpack.c.b16 %v266, %v265
        %v279 = vpack.c.b16 %v268, %v267
        %v280 = vpack.c.b16 %v270, %v269
        %v281 = vpack.c.b16 %v272, %v271
        %v282 = vpack.c.b16 %v274, %v273
        %v287 = vunpack.c.l.b16 %v239
        %v288 = vunpack.c.l.b16 %v240
        %v289 = vunpack.c.l.b16 %v241
        %v290 = vunpack.c.l.b16 %v242
        %v291 = vpack.c.b16 %v288, %v287
        %v292 = vpack.c.b16 %v290, %v289
        %vm295 = vcmask 261120
        %v297 = vsel %vm295, %v275, 0
        %v300 = vsel %vm295, %v276, 0
        %v303 = vsel %vm295, %v277, 0
        %v306 = vsel %vm295, %v278, 0
        %v309 = vsel %vm295, %v279, 0
        %v312 = vsel %vm295, %v280, 0
        %v315 = vsel %vm295, %v281, 0
        %v318 = vsel %vm295, %v282, 0
        %320 = vmatprep.subr.bf16.mxu0 0
        %321 = vmatpush1.bf16.msra.mxu0 0
        %322 = vmatprep.subr.bf16.mxu0 0
        %323 = vmatpush1.bf16.msra.mxu0 0
        %324 = vmatprep.subr.bf16.mxu0 0
        %325 = vmatpush1.bf16.msra.mxu0 0
        %326 = vmatprep.subr.bf16.mxu0 0
        %327 = vmatpush1.bf16.msra.mxu0 0
        %328 = vmatprep.subr.bf16.mxu0 0
        %329 = vmatpush1.bf16.msra.mxu0 0
        %330 = vmatprep.subr.bf16.mxu0 0
        %331 = vmatpush1.bf16.msra.mxu0 0
        %332 = vmatprep.subr.bf16.mxu0 0
        %333 = vmatpush1.bf16.msra.mxu0 %v292
        %334 = vmatprep.subr.bf16.mxu0 0
        %335 = vmatpush1.bf16.msra.mxu0 %v291
        %336 = vmatprep.subr.bf16.mxu0 0
        %337 = vmatpush2.bf16.msra.mxu0 0
        %338 = vmatprep.subr.bf16.mxu0 0
        %339 = vmatpush2.bf16.msra.mxu0 0
        %340 = vmatprep.subr.bf16.mxu0 0
        %341 = vmatpush2.bf16.msra.mxu0 0
        %342 = vmatprep.subr.bf16.mxu0 0
        %343 = vmatpush2.bf16.msra.mxu0 0
        %344 = vmatprep.subr.bf16.mxu0 0
        %345 = vmatpush2.bf16.msra.mxu0 0
        %346 = vmatprep.subr.bf16.mxu0 0
        %347 = vmatpush2.bf16.msra.mxu0 0
        %348 = vmatprep.subr.bf16.mxu0 0
        %349 = vmatpush2.bf16.msra.mxu0 0
        %350 = vmatprep.subr.bf16.mxu0 0
        %351 = vmatpush2.bf16.msra.mxu0 0
        %352 = vmatprep.mubr.bf16.mxu0 0
        %353 = vmatmul.mubr.bf16.gmra.mxu0 %v297
        %v354 = vpop.f32.mrf.mxu0
        %v355 = vadd.f32 0.0, %v354
        %v356 = vpop.f32.mrf.mxu0
        %v357 = vpop.f32.mrf.mxu0
        %v358 = vadd.f32 0.0, %v357
        %v359 = vpop.f32.mrf.mxu0
        %360 = vmatprep.mubr.bf16.mxu0 0
        %361 = vmatmul.mubr.bf16.gmra.mxu0 %v300
        %v362 = vpop.f32.mrf.mxu0
        %v363 = vadd.f32 0.0, %v362
        %v364 = vpop.f32.mrf.mxu0
        %v365 = vpop.f32.mrf.mxu0
        %v366 = vadd.f32 0.0, %v365
        %v367 = vpop.f32.mrf.mxu0
        %368 = vmatprep.mubr.bf16.mxu0 0
        %369 = vmatmul.mubr.bf16.gmra.mxu0 %v303
        %v370 = vpop.f32.mrf.mxu0
        %v371 = vadd.f32 0.0, %v370
        %v372 = vpop.f32.mrf.mxu0
        %v373 = vpop.f32.mrf.mxu0
        %v374 = vadd.f32 0.0, %v373
        %v375 = vpop.f32.mrf.mxu0
        %376 = vmatprep.mubr.bf16.mxu0 0
        %377 = vmatmul.mubr.bf16.gmra.mxu0 %v306
        %v378 = vpop.f32.mrf.mxu0
        %v379 = vadd.f32 0.0, %v378
        %v380 = vpop.f32.mrf.mxu0
        %v381 = vpop.f32.mrf.mxu0
        %v382 = vadd.f32 0.0, %v381
        %v383 = vpop.f32.mrf.mxu0
        %384 = vmatprep.mubr.bf16.mxu0 0
        %385 = vmatmul.mubr.bf16.gmra.mxu0 %v309
        %v386 = vpop.f32.mrf.mxu0
        %v387 = vadd.f32 0.0, %v386
        %v388 = vpop.f32.mrf.mxu0
        %v389 = vpop.f32.mrf.mxu0
        %v390 = vadd.f32 0.0, %v389
        %v391 = vpop.f32.mrf.mxu0
        %392 = vmatprep.mubr.bf16.mxu0 0
        %393 = vmatmul.mubr.bf16.gmra.mxu0 %v312
        %v394 = vpop.f32.mrf.mxu0
        %v395 = vadd.f32 0.0, %v394
        %v396 = vpop.f32.mrf.mxu0
        %v397 = vpop.f32.mrf.mxu0
        %v398 = vadd.f32 0.0, %v397
        %v399 = vpop.f32.mrf.mxu0
        %400 = vmatprep.mubr.bf16.mxu0 0
        %401 = vmatmul.mubr.bf16.gmra.mxu0 %v315
        %v402 = vpop.f32.mrf.mxu0
        %v403 = vadd.f32 0.0, %v402
        %v404 = vpop.f32.mrf.mxu0
        %v405 = vpop.f32.mrf.mxu0
        %v406 = vadd.f32 0.0, %v405
        %v407 = vpop.f32.mrf.mxu0
        %408 = vmatprep.mubr.bf16.mxu0 0
        %409 = vmatmul.mubr.bf16.gmra.mxu0 %v318
        %v410 = vpop.f32.mrf.mxu0
        %v411 = vadd.f32 0.0, %v410
        %v412 = vpop.f32.mrf.mxu0
        %v413 = vpop.f32.mrf.mxu0
        %v414 = vadd.f32 0.0, %v413
        %v415 = vpop.f32.mrf.mxu0
        %416 = vdwg.mxu0
        %433 = vrot.lane.b32.xlu0 %v355, 126
        %v434 = vpop.permute.xlu0 %433
        %435 = vrot.lane.b32.xlu0 %v358, 126
        %v436 = vpop.permute.xlu0 %435
        %437 = vrot.lane.b32.xlu0 %v363, 126
        %v438 = vpop.permute.xlu0 %437
        %439 = vrot.lane.b32.xlu0 %v366, 126
        %v440 = vpop.permute.xlu0 %439
        %441 = vrot.lane.b32.xlu0 %v371, 126
        %v442 = vpop.permute.xlu0 %441
        %443 = vrot.lane.b32.xlu0 %v374, 126
        %v444 = vpop.permute.xlu0 %443
        %445 = vrot.lane.b32.xlu0 %v379, 126
        %v446 = vpop.permute.xlu0 %445
        %447 = vrot.lane.b32.xlu0 %v382, 126
        %v448 = vpop.permute.xlu0 %447
        %449 = vrot.lane.b32.xlu0 %v387, 126
        %v450 = vpop.permute.xlu0 %449
        %451 = vrot.lane.b32.xlu0 %v390, 126
        %v452 = vpop.permute.xlu0 %451
        %453 = vrot.lane.b32.xlu0 %v395, 126
        %v454 = vpop.permute.xlu0 %453
        %455 = vrot.lane.b32.xlu0 %v398, 126
        %v456 = vpop.permute.xlu0 %455
        %457 = vrot.lane.b32.xlu0 %v403, 126
        %v458 = vpop.permute.xlu0 %457
        %459 = vrot.lane.b32.xlu0 %v406, 126
        %v460 = vpop.permute.xlu0 %459
        %461 = vrot.lane.b32.xlu0 %v411, 126
        %v462 = vpop.permute.xlu0 %461
        %463 = vrot.lane.b32.xlu0 %v414, 126
        %v464 = vpop.permute.xlu0 %463
        %vm481 = vcmask 7168
        %482 = vst.msk [vmem:[%s220] sm:$0xff] %vm481, %v434
        %483 = vst.msk [vmem:[%s220 + $0x8] sm:$0xff] %vm481, %v436
        %484 = vst.msk [vmem:[%s220 + $0x10] sm:$0xff] %vm481, %v438
        %485 = vst.msk [vmem:[%s220 + $0x18] sm:$0xff] %vm481, %v440
        %486 = vst.msk [vmem:[%s220 + $0x20] sm:$0xff] %vm481, %v442
        %487 = vst.msk [vmem:[%s220 + $0x28] sm:$0xff] %vm481, %v444
        %488 = vst.msk [vmem:[%s220 + $0x30] sm:$0xff] %vm481, %v446
        %489 = vst.msk [vmem:[%s220 + $0x38] sm:$0xff] %vm481, %v448
        %490 = vst.msk [vmem:[%s220 + $0x40] sm:$0xff] %vm481, %v450
        %491 = vst.msk [vmem:[%s220 + $0x48] sm:$0xff] %vm481, %v452
        %492 = vst.msk [vmem:[%s220 + $0x50] sm:$0xff] %vm481, %v454
        %493 = vst.msk [vmem:[%s220 + $0x58] sm:$0xff] %vm481, %v456
        %494 = vst.msk [vmem:[%s220 + $0x60] sm:$0xff] %vm481, %v458
        %495 = vst.msk [vmem:[%s220 + $0x68] sm:$0xff] %vm481, %v460
        %496 = vst.msk [vmem:[%s220 + $0x70] sm:$0xff] %vm481, %v462
        %497 = vst.msk [vmem:[%s220 + $0x78] sm:$0xff] %vm481, %v464
        %498 = vrot.lane.b32.xlu0 %v355, 127
        %v499 = vpop.permute.xlu0 %498
        %500 = vrot.lane.b32.xlu0 %v358, 127
        %v501 = vpop.permute.xlu0 %500
        %502 = vrot.lane.b32.xlu0 %v363, 127
        %v503 = vpop.permute.xlu0 %502
        %504 = vrot.lane.b32.xlu0 %v366, 127
        %v505 = vpop.permute.xlu0 %504
        %506 = vrot.lane.b32.xlu0 %v371, 127
        %v507 = vpop.permute.xlu0 %506
        %508 = vrot.lane.b32.xlu0 %v374, 127
        %v509 = vpop.permute.xlu0 %508
        %510 = vrot.lane.b32.xlu0 %v379, 127
        %v511 = vpop.permute.xlu0 %510
        %512 = vrot.lane.b32.xlu0 %v382, 127
        %v513 = vpop.permute.xlu0 %512
        %514 = vrot.lane.b32.xlu0 %v387, 127
        %v515 = vpop.permute.xlu0 %514
        %516 = vrot.lane.b32.xlu0 %v390, 127
        %v517 = vpop.permute.xlu0 %516
        %518 = vrot.lane.b32.xlu0 %v395, 127
        %v519 = vpop.permute.xlu0 %518
        %520 = vrot.lane.b32.xlu0 %v398, 127
        %v521 = vpop.permute.xlu0 %520
        %522 = vrot.lane.b32.xlu0 %v403, 127
        %v523 = vpop.permute.xlu0 %522
        %524 = vrot.lane.b32.xlu0 %v406, 127
        %v525 = vpop.permute.xlu0 %524
        %526 = vrot.lane.b32.xlu0 %v411, 127
        %v527 = vpop.permute.xlu0 %526
        %528 = vrot.lane.b32.xlu0 %v414, 127
        %v529 = vpop.permute.xlu0 %528
        %546 = vxpose.xlu0.b32.start [1/16] %v499, 128
        %547 = vxpose.xlu0.b32.cont [2/16] %v501, 128
        %548 = vxpose.xlu0.b32.cont [3/16] %v503, 128
        %549 = vxpose.xlu0.b32.cont [4/16] %v505, 128
        %550 = vxpose.xlu0.b32.cont [5/16] %v507, 128
        %551 = vxpose.xlu0.b32.cont [6/16] %v509, 128
        %552 = vxpose.xlu0.b32.cont [7/16] %v511, 128
        %553 = vxpose.xlu0.b32.cont [8/16] %v513, 128
        %554 = vxpose.xlu0.b32.cont [9/16] %v515, 128
        %555 = vxpose.xlu0.b32.cont [10/16] %v517, 128
        %556 = vxpose.xlu0.b32.cont [11/16] %v519, 128
        %557 = vxpose.xlu0.b32.cont [12/16] %v521, 128
        %558 = vxpose.xlu0.b32.cont [13/16] %v523, 128
        %559 = vxpose.xlu0.b32.cont [14/16] %v525, 128
        %560 = vxpose.xlu0.b32.cont [15/16] %v527, 128
        %561 = vxpose.xlu0.b32.end [16/16] %v529, 128
        %v562 = vpop.trf.xlu0
        %v563 = vpop.trf.xlu0
        %v564 = vpop.trf.xlu0
        %v565 = vpop.trf.xlu0
        %v566 = vpop.trf.xlu0
        %v567 = vpop.trf.xlu0
        %v568 = vpop.trf.xlu0
        %v569 = vpop.trf.xlu0
        %v570 = vpop.trf.xlu0
        %v571 = vpop.trf.xlu0
        %v572 = vpop.trf.xlu0
        %v573 = vpop.trf.xlu0
        %v574 = vpop.trf.xlu0
        %v575 = vpop.trf.xlu0
        %v576 = vpop.trf.xlu0
        %v577 = vpop.trf.xlu0
        %578 = vst [vmem:[%s208] sm:$0x1] %v562
        %v579 = vlaneseq
        %v580 = vand.u32 %v579, 127
        %vm581 = vcmp.eq.s32.totalorder %v580, 0
        %v582 = vsel %vm581, 1.0, %v355
        %v583 = vsel %vm581, 1.0, %v358
        %v584 = vsel %vm581, 1.0, %v363
        %v585 = vsel %vm581, 1.0, %v366
        %v586 = vsel %vm581, 1.0, %v371
        %v587 = vsel %vm581, 1.0, %v374
        %v588 = vsel %vm581, 1.0, %v379
        %v589 = vsel %vm581, 1.0, %v382
        %v590 = vsel %vm581, 1.0, %v387
        %v591 = vsel %vm581, 1.0, %v390
        %v592 = vsel %vm581, 1.0, %v395
        %v593 = vsel %vm581, 1.0, %v398
        %v594 = vsel %vm581, 1.0, %v403
        %v595 = vsel %vm581, 1.0, %v406
        %v596 = vsel %vm581, 1.0, %v411
        %v597 = vsel %vm581, 1.0, %v414
        %v598 = vpack.c.bf16 %v583, %v582
        %v599 = vpack.c.bf16 %v585, %v584
        %v600 = vpack.c.bf16 %v587, %v586
        %v601 = vpack.c.bf16 %v589, %v588
        %v602 = vpack.c.bf16 %v591, %v590
        %v603 = vpack.c.bf16 %v593, %v592
        %v604 = vpack.c.bf16 %v595, %v594
        %v605 = vpack.c.bf16 %v597, %v596
        %v614 = vunpack.c.l.b16 %v598
        %v615 = vunpack.c.h.b16 %v598
        %v616 = vunpack.c.l.b16 %v599
        %v617 = vunpack.c.h.b16 %v599
        %v618 = vunpack.c.l.b16 %v600
        %v619 = vunpack.c.h.b16 %v600
        %v620 = vunpack.c.l.b16 %v601
        %v621 = vunpack.c.h.b16 %v601
        %v622 = vunpack.c.l.b16 %v602
        %v623 = vunpack.c.h.b16 %v602
        %v624 = vunpack.c.l.b16 %v603
        %v625 = vunpack.c.h.b16 %v603
        %v626 = vunpack.c.l.b16 %v604
        %v627 = vunpack.c.h.b16 %v604
        %v628 = vunpack.c.l.b16 %v605
        %v629 = vunpack.c.h.b16 %v605
        %v630 = vpack.c.b16 %v614, %v614
        %v631 = vpack.c.b16 %v615, %v615
        %v632 = vpack.c.b16 %v616, %v616
        %v633 = vpack.c.b16 %v617, %v617
        %v634 = vpack.c.b16 %v618, %v618
        %v635 = vpack.c.b16 %v619, %v619
        %v636 = vpack.c.b16 %v620, %v620
        %v637 = vpack.c.b16 %v621, %v621
        %v638 = vpack.c.b16 %v622, %v622
        %v639 = vpack.c.b16 %v623, %v623
        %v640 = vpack.c.b16 %v624, %v624
        %v641 = vpack.c.b16 %v625, %v625
        %v642 = vpack.c.b16 %v626, %v626
        %v643 = vpack.c.b16 %v627, %v627
        %v644 = vpack.c.b16 %v628, %v628
        %v645 = vpack.c.b16 %v629, %v629
        %662 = vst [vmem:[%s195] sm:$0xf] %v630
        %663 = vst [vmem:[%s195 + $0x4] sm:$0xf] %v631
        %664 = vst [vmem:[%s195 + $0x8] sm:$0xf] %v632
        %665 = vst [vmem:[%s195 + $0xc] sm:$0xf] %v633
        %666 = vst [vmem:[%s195 + $0x10] sm:$0xf] %v634
        %667 = vst [vmem:[%s195 + $0x14] sm:$0xf] %v635
        %668 = vst [vmem:[%s195 + $0x18] sm:$0xf] %v636
        %669 = vst [vmem:[%s195 + $0x1c] sm:$0xf] %v637
        %670 = vst [vmem:[%s195 + $0x20] sm:$0xf] %v638
        %671 = vst [vmem:[%s195 + $0x24] sm:$0xf] %v639
        %672 = vst [vmem:[%s195 + $0x28] sm:$0xf] %v640
        %673 = vst [vmem:[%s195 + $0x2c] sm:$0xf] %v641
        %674 = vst [vmem:[%s195 + $0x30] sm:$0xf] %v642
        %675 = vst [vmem:[%s195 + $0x34] sm:$0xf] %v643
        %676 = vst [vmem:[%s195 + $0x38] sm:$0xf] %v644
        %677 = vst [vmem:[%s195 + $0x3c] sm:$0xf] %v645
        %s678 = sand.u32 %s77, 1
        %s679 = scalar_lea.sflag [#allocation3], %s678
        %s680 = sand.u32 %s77, 1
        %s681 = smul.addr %s680, 64
        %s682 = scalar_lea.vmem [#allocation2], %s681
        %s683 = smul.u32 16, %s22
        %p684 = scmp.lt.s32.totalorder %s683, 47
        %s685 = scalar_select %p684, %s683, 47
        %s686 = smul.addr %s685, 8
        %s687 = scalar_lea.vmem %s3, %s686
        %s688 = sand.u32 %s129, 1
        %s689 = scalar_lea.sflag [#allocation5], %s688
        %s690 = sand.u32 %s129, 1
        %s691 = scalar_lea.vmem [#allocation4], %s690
        // Predicated region
        $region29: #{tpu_custom_call.1} parent=27 // pred_check
          %p692 = pneg %p87
        $region30: #{tpu_custom_call.1} parent=27 // pred_check_branch
          %694 = sbr.rel (%p692) target = $region32
        $region31: #{tpu_custom_call.1} parent=27 // pred_region
          %s695 = smul.u32 16, %s22
          %s697 = ssub.s32 1024, 1024
          %698 = vsyncadd %s679, %s697
          %s699 = smul.addr %s695, 64
          %s700 = scalar_lea.hbm %s2, %s699
          %s701 = sshll.u32 %s682, 4
          %s702 = int_to_ptr.vmem [resolvable:$true] %s701
          %707 = dma.vmem_to_hbm [thread:$0]  %s702, 1024, %s700, %s679, 64, 64, 4
        $region32: #{tpu_custom_call.1} parent=27 // pred_fallthru
          _
        // Predicated region
        $region33: #{tpu_custom_call.1} parent=27 // pred_check
          %p708 = pneg %p113
        $region34: #{tpu_custom_call.1} parent=27 // pred_check_branch
          %710 = sbr.rel (%p708) target = $region36
        $region35: #{tpu_custom_call.1} parent=27 // pred_region
          %s711 = smul.u32 16, %s22
        $region36: #{tpu_custom_call.1} parent=27 // pred_fallthru
          _
        // Predicated region
        $region37: #{tpu_custom_call.1} parent=27 // pred_check
          %p712 = pneg %p139
        $region38: #{tpu_custom_call.1} parent=27 // pred_check_branch
          %714 = sbr.rel (%p712) target = $region40
        $region39: #{tpu_custom_call.1} parent=27 // pred_region
          %s716 = ssub.s32 16, 16
          %717 = vsyncadd %s689, %s716
          %s718 = smul.addr %s22, 16
          %s719 = scalar_lea.hbm %s4, %s718
          %s721 = sshll.u32 %s691, 4
          %s722 = int_to_ptr.vmem [resolvable:$true] %s721
          %724 = dma.vmem_to_hbm [thread:$0]  %s722, 16, %s719, %s689
        $region40: #{tpu_custom_call.1} parent=27 // pred_fallthru
          _
      $region28: #{tpu_custom_call.1} parent=5 // pred_fallthru
        _
      %p725 = scmp.le.s32.totalorder 2, %s17
      // Predicated region
      $region41: #{tpu_custom_call.1} parent=5 // pred_check
        %p726 = pneg %p725
      $region42: #{tpu_custom_call.1} parent=5 // pred_check_branch
        %728 = sbr.rel (%p726) target = $region44
      $region43: #{tpu_custom_call.1} parent=5 // pred_region
        %s729 = ssub.s32 %s17, 2
        // Predicated region
        $region45: #{tpu_custom_call.1} parent=43 // pred_check
          %p730 = pneg %p93
        $region46: #{tpu_custom_call.1} parent=43 // pred_check_branch
          %732 = sbr.rel (%p730) target = $region48
        $region47: #{tpu_custom_call.1} parent=43 // pred_region
          %s733 = sand.u32 %s78, 1
          %s734 = scalar_lea.sflag [#allocation3], %s733
          %s735 = sand.u32 %s78, 1
          %s736 = smul.addr %s735, 64
          %s737 = scalar_lea.vmem [#allocation2], %s736
          %738 = dma.done %s734, 1024
        $region48: #{tpu_custom_call.1} parent=43 // pred_fallthru
          _
        // Predicated region
        $region49: #{tpu_custom_call.1} parent=43 // pred_check
          %p739 = pneg %p119
        $region50: #{tpu_custom_call.1} parent=43 // pred_check_branch
          %741 = sbr.rel (%p739) target = $region52
        $region51: #{tpu_custom_call.1} parent=43 // pred_region
          %s742 = smul.u32 16, %s23
          %p743 = scmp.lt.s32.totalorder %s742, 47
          %s744 = scalar_select %p743, %s742, 47
          %s745 = smul.addr %s744, 8
          %s746 = scalar_lea.vmem %s3, %s745
        $region52: #{tpu_custom_call.1} parent=43 // pred_fallthru
          _
        // Predicated region
        $region53: #{tpu_custom_call.1} parent=43 // pred_check
          %p747 = pneg %p145
        $region54: #{tpu_custom_call.1} parent=43 // pred_check_branch
          %749 = sbr.rel (%p747) target = $region56
        $region55: #{tpu_custom_call.1} parent=43 // pred_region
          %s750 = sand.u32 %s130, 1
          %s751 = scalar_lea.sflag [#allocation5], %s750
          %s752 = sand.u32 %s130, 1
          %s753 = scalar_lea.vmem [#allocation4], %s752
          %754 = dma.done %s751, 16
        $region56: #{tpu_custom_call.1} parent=43 // pred_fallthru
          _
      $region44: #{tpu_custom_call.1} parent=5 // pred_fallthru
        _
    $region6: #{tpu_custom_call.1} parent=1 // loop_footer
      %s21 = sadd.s32 1, %s17
    $region7: #{tpu_custom_call.1} parent=1 // loop_footer_branch
      %16 = sbr.rel target = $region3
    $region8: #{tpu_custom_call.1} parent=1 // loop_exit
      _
    %755 = vsyncpa [#allocation3], 1
    %s756 = scalar_lea.sflag [#allocation3], 1
    %757 = vsyncpa %s756, 1
    %758 = vsyncpa [#allocation5], 1
    %s759 = scalar_lea.sflag [#allocation5], 1
    %760 = vsyncpa %s759, 1

</llo_original>
